<compile_context>
chip_gen: v7x
topology: tpu7x:2x2x1
jax: 0.10.0
libtpu: 0.0.40
codegen_flags: <defaults>
</compile_context>

<pallas_src>
import jax
import jax.numpy as jnp
import numpy as np
from jax import lax
from jax.experimental import pallas as pl
from jax.experimental.pallas import tpu as pltpu


_CONTRACT_LAST = (((1,), (1,)), ((), ()))   # A(m,k) x B(n,k) -> (m,n)


def _qk_rope_kernel(x_ref, w_ref, cos_ref, sin_ref, out_ref):
    """Project `hpb` heads for one (batch, seq-tile) and apply RoPE.

    x_ref:   (1, tsp, H)      bf16   hidden tile
    w_ref:   (1, hpb*D, H)    bf16   stacked projection rows for hpb heads
    cos_ref: (1, tsp, D)      bf16
    sin_ref: (1, tsp, D)      bf16   (rotate_half sign already folded in)
    out_ref: (1, hpb, tsp, D) bf16   RoPE'd projections
    """
    hpb = out_ref.shape[1]
    d = out_ref.shape[3]

    qk = lax.dot_general(x_ref[0], w_ref[0], _CONTRACT_LAST,
                         preferred_element_type=jnp.float32)    # (tsp, hpb*D)
    cos = cos_ref[0].astype(jnp.float32)
    sin = sin_ref[0].astype(jnp.float32)
    for j in range(hpb):                                         # static unroll
        t = qk[:, j * d:(j + 1) * d]                             # (tsp, D)
        t = t * cos + pltpu.roll(t, d // 2, 1) * sin             # RoPE via XLU
        out_ref[0, j] = t.astype(out_ref.dtype)


def _attn_weights_kernel(q_ref, k_ref, out_ref):
    """Unscaled q @ k^T followed by row softmax for one (batch, head, q-tile).

    q_ref:   (1, 1, tsq, D) bf16
    k_ref:   (1, 1, S,  D)  bf16  (shared across the whole kv group)
    out_ref: (1, 1, tsq, S) f32
    """
    s = lax.dot_general(q_ref[0, 0], k_ref[0, 0], _CONTRACT_LAST,
                        preferred_element_type=jnp.float32)      # (tsq, S)
    m = jnp.max(s, axis=-1, keepdims=True)
    p = jnp.exp(s - m)
    inv = pl.reciprocal(jnp.sum(p, axis=-1, keepdims=True), approx=False)
    out_ref[0, 0] = p * inv


def _vmem_limit_bytes():
    """Generation-aware scoped-VMEM limit (leave headroom below physical)."""
    try:
        kind = jax.devices()[0].device_kind.lower()
    except Exception:
        kind = ""
    if "v7" in kind:
        return 48 * 1024 * 1024       # 64 MiB physical on v7x
    if "v4" in kind or "v5" in kind or "v6" in kind:
        return 96 * 1024 * 1024       # 128 MiB physical
    return 48 * 1024 * 1024           # conservative default


def llama_attention_weights_only(hidden_states, wq, wk, cos, sin,
                                 num_query_heads, num_kv_heads, head_dim,
                                 *, tsq=None, tsp=None):
    """
    hidden_states: (B, S, H) float32
    wq: (Hq*D, H) float32   (torch Linear weight layout: out_features x in_features)
    wk: (Hkv*D, H) float32
    cos, sin: (B, S, D) float32
    returns: (B, Hq, S, S) float32 attention weights (softmax of unscaled q@k^T)
    """
    B, S, H = hidden_states.shape
    Hq, Hkv, D = num_query_heads, num_kv_heads, head_dim
    expand = Hq // Hkv
    nH = Hq + Hkv
    assert Hq == Hkv * expand
    assert D % 2 == 0
    if tsq is None:
        tsq = min(256, S)     # 256 fills the MXU M on v6e/v7x (use 128 on v5e)
    if tsp is None:
        tsp = min(256, S)
    assert S % tsq == 0 and tsq % 16 == 0
    assert S % tsp == 0 and tsp % 16 == 0

    hpb = 2 if nH % 2 == 0 else 1      # heads per projection step (MXU N fill)

    # ---- host-side prep (free reshapes / cheap casts) -----------------------
    # torch Linear weight row (h*D + d) -> w[h, d, :]; q heads first, kv after.
    w_all = jnp.concatenate([wq.reshape(Hq, D, H), wk.reshape(Hkv, D, H)], 0)
    w_all = w_all.reshape(nH // hpb, hpb * D, H).astype(jnp.bfloat16)
    x_bf = hidden_states.astype(jnp.bfloat16)
    # Fold the rotate_half sign into sin:
    #   rotate_half(t) * sin == roll(t, D/2) * (sign * sin), sign = [-1.., +1..]
    sign = jnp.concatenate([-jnp.ones((D // 2,), jnp.float32),
                            jnp.ones((D // 2,), jnp.float32)])
    cos_bf = cos.astype(jnp.bfloat16)
    sin_bf = (sin * sign).astype(jnp.bfloat16)

    vmem_limit = _vmem_limit_bytes()

    # ---- pass 1: fused Q/K projection + RoPE -> (B, Hq+Hkv, S, D) bf16 ------
    proj_cost = pl.CostEstimate(
        flops=int(2 * B * nH * S * D * H),
        transcendentals=0,
        bytes_accessed=int(2 * (B * S * H + B * nH * D * H
                                + B * nH * S * D + 2 * B * S * D)),
    )
    qk = pl.pallas_call(
        _qk_rope_kernel,
        out_shape=jax.ShapeDtypeStruct((B, nH, S, D), jnp.bfloat16),
        grid_spec=pltpu.PrefetchScalarGridSpec(
            num_scalar_prefetch=0,
            grid=(B, S // tsp, nH // hpb),      # head axis innermost: hidden /
            in_specs=[                          # cos / sin fetched once per tile
                pl.BlockSpec((1, tsp, H), lambda b, s, g: (b, s, 0)),
                pl.BlockSpec((1, hpb * D, H), lambda b, s, g: (g, 0, 0)),
                pl.BlockSpec((1, tsp, D), lambda b, s, g: (b, s, 0)),
                pl.BlockSpec((1, tsp, D), lambda b, s, g: (b, s, 0)),
            ],
            out_specs=pl.BlockSpec((1, hpb, tsp, D),
                                   lambda b, s, g: (b, g, s, 0)),
        ),
        compiler_params=pltpu.CompilerParams(
            dimension_semantics=("parallel", "parallel", "arbitrary"),
            vmem_limit_bytes=vmem_limit),
        cost_estimate=proj_cost,
    )(x_bf, w_all, cos_bf, sin_bf)

    # ---- pass 2: scores + softmax -> (B, Hq, S, S) f32 ----------------------
    attn_cost = pl.CostEstimate(
        flops=int(2 * B * Hq * S * S * D),
        transcendentals=int(B * Hq * S * S),
        bytes_accessed=int(B * Hq * S * S * 4 + 2 * B * Hq * S * D * 2),
    )
    out = pl.pallas_call(
        _attn_weights_kernel,
        out_shape=jax.ShapeDtypeStruct((B, Hq, S, S), jnp.float32),
        grid_spec=pltpu.PrefetchScalarGridSpec(
            num_scalar_prefetch=0,
            grid=(B, Hq, S // tsq),
            in_specs=[
                # RoPE'd query tile: q head h lives at combined head index h.
                pl.BlockSpec((1, 1, tsq, D), lambda b, h, sq: (b, h, sq, 0)),
                # RoPE'd K row for the kv group: GQA repeat_interleave is done
                # purely via the index map — no data duplication in HBM.
                pl.BlockSpec((1, 1, S, D),
                             lambda b, h, sq: (b, Hq + h // expand, 0, 0)),
            ],
            out_specs=pl.BlockSpec((1, 1, tsq, S),
                                   lambda b, h, sq: (b, h, sq, 0)),
        ),
        compiler_params=pltpu.CompilerParams(
            dimension_semantics=("parallel", "parallel", "parallel"),
            vmem_limit_bytes=vmem_limit),
        cost_estimate=attn_cost,
    )(qk, qk)
    return out


def _reference(hidden_states, wq, wk, cos, sin, Hq, Hkv, D):
    """Pure-JAX f32 mirror of the PyTorch forward for verification."""
    B, S, H = hidden_states.shape
    expand = Hq // Hkv
    q = hidden_states @ wq.T                               # (B, S, Hq*D)
    k = hidden_states @ wk.T                               # (B, S, Hkv*D)
    q = q.reshape(B, S, Hq, D).transpose(0, 2, 1, 3)       # (B, Hq, S, D)
    k = k.reshape(B, S, Hkv, D).transpose(0, 2, 1, 3)      # (B, Hkv, S, D)
    cos_u = cos[:, None, :, :]
    sin_u = sin[:, None, :, :]

    def rot(x):
        x1, x2 = x[..., :D // 2], x[..., D // 2:]
        return jnp.concatenate([-x2, x1], axis=-1)

    q = q * cos_u + rot(q) * sin_u
    k = k * cos_u + rot(k) * sin_u
    k = jnp.repeat(k, expand, axis=1)                      # repeat_interleave dim=1
    scores = jnp.einsum("bhqd,bhkd->bhqk", q, k)
    scores = scores - jnp.max(scores, axis=-1, keepdims=True)
    e = jnp.exp(scores)
    return e / jnp.sum(e, axis=-1, keepdims=True)


if __name__ == "__main__":
    # Small but layout-natural shapes (D multiple of 128, S gives 2 tiles of
    # each kind so every grid axis is exercised).
    B, S, H = 2, 256, 256
    D = 128               # head_dim
    Hq = 4                # num_query_heads  -> q_proj out_features = 512
    Hkv = 2               # num_kv_heads     -> k_proj out_features = 256
    TSQ = 128             # query-tile size
    TSP = 128             # projection seq-tile size

    key = jax.random.PRNGKey(0)
    k1, k2, k3 = jax.random.split(key, 3)

    hidden_states = jax.random.normal(k1, (B, S, H), dtype=jnp.float32)
    wq = jax.random.normal(k2, (Hq * D, H), dtype=jnp.float32) * 0.015
    wk = jax.random.normal(k3, (Hkv * D, H), dtype=jnp.float32) * 0.015
    # NOTE: Llama attention projections have bias=False; no bias terms used.

    # Deterministic rotary embeddings (standard Llama construction).
    inv_freq = 1.0 / (10000.0 ** (jnp.arange(0, D, 2, dtype=jnp.float32) / D))
    pos = jnp.arange(S, dtype=jnp.float32)
    freqs = pos[:, None] * inv_freq[None, :]               # (S, D/2)
    emb = jnp.concatenate([freqs, freqs], axis=-1)         # (S, D)
    cos = jnp.broadcast_to(jnp.cos(emb)[None], (B, S, D)).astype(jnp.float32)
    sin = jnp.broadcast_to(jnp.sin(emb)[None], (B, S, D)).astype(jnp.float32)

    attn_weights = llama_attention_weights_only(
        hidden_states, wq, wk, cos, sin, Hq, Hkv, D, tsq=TSQ, tsp=TSP)
    attn_weights = jax.block_until_ready(attn_weights)

    ref = _reference(hidden_states, wq, wk, cos, sin, Hq, Hkv, D)
    # bf16 matmul inputs / bf16 cos-sin -> tolerance loosened vs f32 reference.
    np.testing.assert_allclose(np.asarray(attn_weights), np.asarray(ref),
                               rtol=2e-2, atol=1e-2)
    assert attn_weights.shape == (B, Hq, S, S)
    print("KERNEL_OK")
</pallas_src>

<mosaic_0001>
module attributes {stable_mosaic.version = 11 : i64} {
  func.func @_qk_rope_kernel(%arg0: i32, %arg1: i32, %arg2: i32, %arg3: memref<1x128x256xbf16, #tpu.memory_space<vmem>>, %arg4: memref<1x256x256xbf16, #tpu.memory_space<vmem>>, %arg5: memref<1x128x128xbf16, #tpu.memory_space<vmem>>, %arg6: memref<1x128x128xbf16, #tpu.memory_space<vmem>>, %arg7: memref<1x2x128x128xbf16, #tpu.memory_space<vmem>>) attributes {dimension_semantics = [#tpu.dimension_semantics<parallel>, #tpu.dimension_semantics<parallel>, #tpu.dimension_semantics<arbitrary>], iteration_bounds = array<i64: 2, 2, 3>, scalar_prefetch = 0 : i64, scratch_operands = 0 : i64, tpu.core_type = #tpu.core_type<tc>, window_params = [{transform_indices = @transform_0, window_bounds = array<i64: 1, 128, 256>}, {transform_indices = @transform_1, window_bounds = array<i64: 1, 256, 256>}, {transform_indices = @transform_2, window_bounds = array<i64: 1, 128, 128>}, {transform_indices = @transform_3, window_bounds = array<i64: 1, 128, 128>}, {transform_indices = @transform_4, window_bounds = array<i64: 1, 2, 128, 128>}]} {
    %c0 = arith.constant 0 : index
    %c0_0 = arith.constant 0 : index
    %c0_1 = arith.constant 0 : index
    %0 = vector.load %arg3[%c0, %c0_0, %c0_1] : memref<1x128x256xbf16, #tpu.memory_space<vmem>>, vector<1x128x256xbf16>
    %1 = vector.shape_cast %0 : vector<1x128x256xbf16> to vector<128x256xbf16>
    %c0_2 = arith.constant 0 : index
    %c0_3 = arith.constant 0 : index
    %c0_4 = arith.constant 0 : index
    %2 = vector.load %arg4[%c0_2, %c0_3, %c0_4] : memref<1x256x256xbf16, #tpu.memory_space<vmem>>, vector<1x256x256xbf16>
    %3 = vector.shape_cast %2 : vector<1x256x256xbf16> to vector<256x256xbf16>
    %cst = arith.constant dense<0.000000e+00> : vector<128x256xf32>
    %4 = tpu.matmul %1, %3, %cst {dimension_numbers = #tpu.dot_dimension_numbers<[1], [1], [0], [0], [0, 0, 1, 0], [], []>} : vector<128x256xbf16>, vector<256x256xbf16>, vector<128x256xf32> -> vector<128x256xf32>
    %c0_5 = arith.constant 0 : index
    %c0_6 = arith.constant 0 : index
    %c0_7 = arith.constant 0 : index
    %5 = vector.load %arg5[%c0_5, %c0_6, %c0_7] : memref<1x128x128xbf16, #tpu.memory_space<vmem>>, vector<1x128x128xbf16>
    %6 = vector.shape_cast %5 : vector<1x128x128xbf16> to vector<128x128xbf16>
    %7 = arith.extf %6 : vector<128x128xbf16> to vector<128x128xf32>
    %c0_8 = arith.constant 0 : index
    %c0_9 = arith.constant 0 : index
    %c0_10 = arith.constant 0 : index
    %8 = vector.load %arg6[%c0_8, %c0_9, %c0_10] : memref<1x128x128xbf16, #tpu.memory_space<vmem>>, vector<1x128x128xbf16>
    %9 = vector.shape_cast %8 : vector<1x128x128xbf16> to vector<128x128xbf16>
    %10 = arith.extf %9 : vector<128x128xbf16> to vector<128x128xf32>
    %11 = vector.extract_strided_slice %4 {offsets = [0, 0], sizes = [128, 128], strides = [1, 1]} : vector<128x256xf32> to vector<128x128xf32>
    %12 = arith.mulf %11, %7 : vector<128x128xf32>
    %c64_i32 = arith.constant 64 : i32
    %13 = tpu.dynamic_rotate %11 by %c64_i32 dim 1 : vector<128x128xf32>, i32 -> vector<128x128xf32>
    %14 = arith.mulf %13, %10 : vector<128x128xf32>
    %15 = arith.addf %12, %14 : vector<128x128xf32>
    %16 = arith.truncf %15 : vector<128x128xf32> to vector<128x128xbf16>
    %c0_11 = arith.constant 0 : index
    %c0_12 = arith.constant 0 : index
    %c0_13 = arith.constant 0 : index
    %c0_14 = arith.constant 0 : index
    %17 = vector.load %arg7[%c0_11, %c0_12, %c0_13, %c0_14] : memref<1x2x128x128xbf16, #tpu.memory_space<vmem>>, vector<1x1x128x128xbf16>
    %18 = vector.shape_cast %17 : vector<1x1x128x128xbf16> to vector<128x128xbf16>
    %19 = vector.shape_cast %16 : vector<128x128xbf16> to vector<1x1x128x128xbf16>
    tpu.vector_store %arg7[%c0_11, %c0_12, %c0_13, %c0_14], %19 {strides = array<i32>} : memref<1x2x128x128xbf16, #tpu.memory_space<vmem>>, vector<1x1x128x128xbf16>,
    %20 = vector.extract_strided_slice %4 {offsets = [0, 128], sizes = [128, 128], strides = [1, 1]} : vector<128x256xf32> to vector<128x128xf32>
    %21 = arith.mulf %20, %7 : vector<128x128xf32>
    %c64_i32_15 = arith.constant 64 : i32
    %22 = tpu.dynamic_rotate %20 by %c64_i32_15 dim 1 : vector<128x128xf32>, i32 -> vector<128x128xf32>
    %23 = arith.mulf %22, %10 : vector<128x128xf32>
    %24 = arith.addf %21, %23 : vector<128x128xf32>
    %25 = arith.truncf %24 : vector<128x128xf32> to vector<128x128xbf16>
    %c0_16 = arith.constant 0 : index
    %c1 = arith.constant 1 : index
    %c0_17 = arith.constant 0 : index
    %c0_18 = arith.constant 0 : index
    %26 = vector.load %arg7[%c0_16, %c1, %c0_17, %c0_18] : memref<1x2x128x128xbf16, #tpu.memory_space<vmem>>, vector<1x1x128x128xbf16>
    %27 = vector.shape_cast %26 : vector<1x1x128x128xbf16> to vector<128x128xbf16>
    %28 = vector.shape_cast %25 : vector<128x128xbf16> to vector<1x1x128x128xbf16>
    tpu.vector_store %arg7[%c0_16, %c1, %c0_17, %c0_18], %28 {strides = array<i32>} : memref<1x2x128x128xbf16, #tpu.memory_space<vmem>>, vector<1x1x128x128xbf16>,
    return
  }
  func.func @transform_0(%arg0: i32, %arg1: i32, %arg2: i32) -> (i32, i32, i32) {
    %c0_i32 = arith.constant 0 : i32
    %c0_i32_0 = arith.constant 0 : i32
    return %arg0, %arg1, %c0_i32 : i32, i32, i32
  }
  func.func @transform_1(%arg0: i32, %arg1: i32, %arg2: i32) -> (i32, i32, i32) {
    %c0_i32 = arith.constant 0 : i32
    %c0_i32_0 = arith.constant 0 : i32
    %c0_i32_1 = arith.constant 0 : i32
    return %arg2, %c0_i32, %c0_i32_0 : i32, i32, i32
  }
  func.func @transform_2(%arg0: i32, %arg1: i32, %arg2: i32) -> (i32, i32, i32) {
    %c0_i32 = arith.constant 0 : i32
    %c0_i32_0 = arith.constant 0 : i32
    return %arg0, %arg1, %c0_i32 : i32, i32, i32
  }
  func.func @transform_3(%arg0: i32, %arg1: i32, %arg2: i32) -> (i32, i32, i32) {
    %c0_i32 = arith.constant 0 : i32
    %c0_i32_0 = arith.constant 0 : i32
    return %arg0, %arg1, %c0_i32 : i32, i32, i32
  }
  func.func @transform_4(%arg0: i32, %arg1: i32, %arg2: i32) -> (i32, i32, i32, i32) {
    %c0_i32 = arith.constant 0 : i32
    %c0_i32_0 = arith.constant 0 : i32
    return %arg0, %arg2, %arg1, %c0_i32 : i32, i32, i32, i32
  }
}

</mosaic_0001>

<llo_original>
// kernel: tpu_custom_call.1
$region0: #{tpu_custom_call.1}
  #allocation0 [shape = 'u32[]', space=smem, size = 0x4, offset = 0x4, fixed_abs, tag = 'smem constant byte address 0x4 - core index']
  #allocation1 [shape = 'u32[144,128]{1,0:T(1,128)}', space=vmem, size = 0x12000, scoped, tag = 'internal scratch']
  #allocation11 [shape = 's32[]', space=sflag, size = 0x4, offset = 0, fixed_abs, tag = 'sflag constant byte address 0x0 - dummy sync flag']
  %s0 = inlined_call_operand.hbm [shape: bf16[2,256,256], index: 0, kind: input, shape index: {}]
  %s1 = inlined_call_operand.hbm [shape: bf16[3,256,256], index: 1, kind: input, shape index: {}]
  %s2 = inlined_call_operand.hbm [shape: bf16[2,256,128], index: 2, kind: input, shape index: {}]
  %s3 = inlined_call_operand.hbm [shape: bf16[2,256,128], index: 3, kind: input, shape index: {}]
  %s4 = inlined_call_operand.hbm [shape: bf16[2,6,256,128], index: 4, kind: output, shape index: {}]
  %s5 = sld [smem:[#allocation0]]
  $region65: #{tpu_custom_call.1} parent=0
    _
  %s7 = ssub.s32 1, %s5
  %s8 = scalar_select 0, %s7, %s5
  $region1: #{tpu_custom_call.1} parent=0
    #allocation2 [shape = 'u8[131072]{0}', space=vmem, size = 0x20000, scoped, tag = 'input window, operand 0']
    #allocation3 [shape = 's32[2]{0}', space=sflag, size = 0x8, scoped, tag = 'scoped memory for tpu_custom_call.1']
    #allocation4 [shape = 's32[2]{0}', space=sflag, size = 0x8, scoped, tag = 'scoped memory for tpu_custom_call.1']
    #allocation5 [shape = 'u8[262144]{0}', space=vmem, size = 0x40000, scoped, tag = 'input window, operand 1']
    #allocation6 [shape = 's32[2]{0}', space=sflag, size = 0x8, scoped, tag = 'scoped memory for tpu_custom_call.1']
    #allocation7 [shape = 'u8[65536]{0}', space=vmem, size = 0x10000, scoped, tag = 'input window, operand 2']
    #allocation8 [shape = 'u8[65536]{0}', space=vmem, size = 0x10000, scoped, tag = 'input window, operand 3']
    #allocation9 [shape = 's32[2]{0}', space=sflag, size = 0x8, scoped, tag = 'scoped memory for tpu_custom_call.1']
    #allocation10 [shape = 'u8[131072]{0}', space=vmem, size = 0x20000, scoped, tag = 'output window, operand 0']
    %9 = vsyncpa [#allocation3], 0
    %s10 = scalar_lea.sflag [#allocation3], 1
    %11 = vsyncpa %s10, 0
    %12 = vsyncpa [#allocation6], 0
    %s13 = scalar_lea.sflag [#allocation6], 1
    %14 = vsyncpa %s13, 0
    %15 = vsyncpa [#allocation9], 0
    %s16 = scalar_lea.sflag [#allocation9], 1
    %17 = vsyncpa %s16, 0
    %18 = vsyncpa [#allocation4], 0
    %s19 = scalar_lea.sflag [#allocation4], 1
    %20 = vsyncpa %s19, 0
    loop: start=0, step=1, limit=14
    $region2: #{tpu_custom_call.1} parent=1 // loop_pre_header
      _
    $region3: #{tpu_custom_call.1} parent=1 // loop_header
      %s22 = sphi 0, %s26
      %p23 = scmp.ge.s32.totalorder %s22, 14
      %s29 = sphi 0, %s48
      %s30 = sphi 0, %s44
      %s31 = sphi 0, %s40
      %s32 = sphi 0, %s29
      %s33 = sphi 0, %s30
      %s34 = sphi 0, %s31
      %s35 = sphi 0, %s32
      %s36 = sphi 0, %s33
      %s37 = sphi 0, %s34
      %s53 = sphi 0, %s55
      %s56 = sphi 0, %s53
      %s57 = sphi 0, %s56
      %s73 = sphi 0, %s57
      %s79 = sphi 0, %s81
      %s82 = sphi 0, %s79
      %s83 = sphi 0, %s82
      %s99 = sphi 0, %s83
      %s107 = sphi 0, %s109
      %s110 = sphi 0, %s107
      %s111 = sphi 0, %s110
      %s127 = sphi 0, %s111
      %s135 = sphi 0, %s137
      %s138 = sphi 0, %s135
      %s139 = sphi 0, %s138
      %s155 = sphi 0, %s139
      %s165 = sphi 0, %s167
      %s168 = sphi 0, %s165
      %s169 = sphi 0, %s168
      %s185 = sphi 0, %s169
    $region4: #{tpu_custom_call.1} parent=1 // loop_header_branch
      %25 = sbr.rel (%p23) target = $region8
    $region5: #{tpu_custom_call.1} parent=1 // loop_body
      %s27 = ssub.s32 %s22, 1
      %s28 = ssub.s32 %s22, 2
      %s38 = sadd.s32 1, %s31
      %p39 = scmp.ge.s32.totalorder %s38, 3
      %s40 = scalar_select %p39, 0, %s38
      %s41 = sadd.s32 1, %s30
      %s42 = scalar_select %p39, %s41, %s30
      %p43 = scmp.ge.s32.totalorder %s42, 2
      %s44 = scalar_select %p43, 0, %s42
      %s45 = sadd.s32 1, %s29
      %s46 = scalar_select %p43, %s45, %s29
      %p47 = scmp.ge.s32.totalorder %s46, 2
      %s48 = scalar_select %p47, 0, %s46
      %s49 = ssub.s32 %s29, %s48
      %s50 = ssub.s32 %s30, %s44
      %s51 = sor.u32 %s49, %s50
      %p52 = scmp.eq.s32.totalorder %s51, 0
      %s54 = sadd.s32 %s53, 1
      %s55 = scalar_select %p52, %s53, %s54
      %p58 = pneg %p52
      %p59 = scmp.eq.s32.totalorder %s22, 11
      %p60 = por %p58, %p59
      %p61 = scmp.ne.s32.totalorder %s53, %s56
      %p62 = scmp.eq.s32.totalorder %s22, 0
      %p63 = por %p61, %p62
      %p64 = scmp.ne.s32.totalorder %s53, %s56
      %p65 = scmp.eq.s32.totalorder %s27, 11
      %p66 = por %p64, %p65
      %p67 = scmp.ne.s32.totalorder %s56, %s57
      %p68 = scmp.eq.s32.totalorder %s27, 0
      %p69 = por %p67, %p68
      %p70 = scmp.ne.s32.totalorder %s56, %s57
      %p71 = scmp.eq.s32.totalorder %s28, 11
      %p72 = por %p70, %p71
      %p74 = scmp.ne.s32.totalorder %s57, %s73
      %p75 = scmp.eq.s32.totalorder %s28, 0
      %p76 = por %p74, %p75
      %s77 = ssub.s32 %s31, %s40
      %p78 = scmp.eq.s32.totalorder %s77, 0
      %s80 = sadd.s32 %s79, 1
      %s81 = scalar_select %p78, %s79, %s80
      %p84 = pneg %p78
      %p85 = scmp.eq.s32.totalorder %s22, 11
      %p86 = por %p84, %p85
      %p87 = scmp.ne.s32.totalorder %s79, %s82
      %p88 = scmp.eq.s32.totalorder %s22, 0
      %p89 = por %p87, %p88
      %p90 = scmp.ne.s32.totalorder %s79, %s82
      %p91 = scmp.eq.s32.totalorder %s27, 11
      %p92 = por %p90, %p91
      %p93 = scmp.ne.s32.totalorder %s82, %s83
      %p94 = scmp.eq.s32.totalorder %s27, 0
      %p95 = por %p93, %p94
      %p96 = scmp.ne.s32.totalorder %s82, %s83
      %p97 = scmp.eq.s32.totalorder %s28, 11
      %p98 = por %p96, %p97
      %p100 = scmp.ne.s32.totalorder %s83, %s99
      %p101 = scmp.eq.s32.totalorder %s28, 0
      %p102 = por %p100, %p101
      %s103 = ssub.s32 %s29, %s48
      %s104 = ssub.s32 %s30, %s44
      %s105 = sor.u32 %s103, %s104
      %p106 = scmp.eq.s32.totalorder %s105, 0
      %s108 = sadd.s32 %s107, 1
      %s109 = scalar_select %p106, %s107, %s108
      %p112 = pneg %p106
      %p113 = scmp.eq.s32.totalorder %s22, 11
      %p114 = por %p112, %p113
      %p115 = scmp.ne.s32.totalorder %s107, %s110
      %p116 = scmp.eq.s32.totalorder %s22, 0
      %p117 = por %p115, %p116
      %p118 = scmp.ne.s32.totalorder %s107, %s110
      %p119 = scmp.eq.s32.totalorder %s27, 11
      %p120 = por %p118, %p119
      %p121 = scmp.ne.s32.totalorder %s110, %s111
      %p122 = scmp.eq.s32.totalorder %s27, 0
      %p123 = por %p121, %p122
      %p124 = scmp.ne.s32.totalorder %s110, %s111
      %p125 = scmp.eq.s32.totalorder %s28, 11
      %p126 = por %p124, %p125
      %p128 = scmp.ne.s32.totalorder %s111, %s127
      %p129 = scmp.eq.s32.totalorder %s28, 0
      %p130 = por %p128, %p129
      %s131 = ssub.s32 %s29, %s48
      %s132 = ssub.s32 %s30, %s44
      %s133 = sor.u32 %s131, %s132
      %p134 = scmp.eq.s32.totalorder %s133, 0
      %s136 = sadd.s32 %s135, 1
      %s137 = scalar_select %p134, %s135, %s136
      %p140 = pneg %p134
      %p141 = scmp.eq.s32.totalorder %s22, 11
      %p142 = por %p140, %p141
      %p143 = scmp.ne.s32.totalorder %s135, %s138
      %p144 = scmp.eq.s32.totalorder %s22, 0
      %p145 = por %p143, %p144
      %p146 = scmp.ne.s32.totalorder %s135, %s138
      %p147 = scmp.eq.s32.totalorder %s27, 11
      %p148 = por %p146, %p147
      %p149 = scmp.ne.s32.totalorder %s138, %s139
      %p150 = scmp.eq.s32.totalorder %s27, 0
      %p151 = por %p149, %p150
      %p152 = scmp.ne.s32.totalorder %s138, %s139
      %p153 = scmp.eq.s32.totalorder %s28, 11
      %p154 = por %p152, %p153
      %p156 = scmp.ne.s32.totalorder %s139, %s155
      %p157 = scmp.eq.s32.totalorder %s28, 0
      %p158 = por %p156, %p157
      %s159 = ssub.s32 %s29, %s48
      %s160 = ssub.s32 %s31, %s40
      %s161 = sor.u32 %s159, %s160
      %s162 = ssub.s32 %s30, %s44
      %s163 = sor.u32 %s161, %s162
      %p164 = scmp.eq.s32.totalorder %s163, 0
      %s166 = sadd.s32 %s165, 1
      %s167 = scalar_select %p164, %s165, %s166
      %p170 = pneg %p164
      %p171 = scmp.eq.s32.totalorder %s22, 11
      %p172 = por %p170, %p171
      %p173 = scmp.ne.s32.totalorder %s165, %s168
      %p174 = scmp.eq.s32.totalorder %s22, 0
      %p175 = por %p173, %p174
      %p176 = scmp.ne.s32.totalorder %s165, %s168
      %p177 = scmp.eq.s32.totalorder %s27, 11
      %p178 = por %p176, %p177
      %p179 = scmp.ne.s32.totalorder %s168, %s169
      %p180 = scmp.eq.s32.totalorder %s27, 0
      %p181 = por %p179, %p180
      %p182 = scmp.ne.s32.totalorder %s168, %s169
      %p183 = scmp.eq.s32.totalorder %s28, 11
      %p184 = por %p182, %p183
      %p186 = scmp.ne.s32.totalorder %s169, %s185
      %p187 = scmp.eq.s32.totalorder %s28, 0
      %p188 = por %p186, %p187
      %p189 = scmp.le.s32.totalorder 1, %s22
      %p190 = scmp.lt.s32.totalorder %s22, 13
      %p191 = pnand %p189, %p190
      %p192 = pneg %p191
      // Predicated region
      $region9: #{tpu_custom_call.1} parent=5 // pred_check
        _
      $region10: #{tpu_custom_call.1} parent=5 // pred_check_branch
        %194 = sbr.rel (%p191) target = $region12
      $region11: #{tpu_custom_call.1} parent=5 // pred_region
        %s195 = ssub.s32 %s22, 1
      $region12: #{tpu_custom_call.1} parent=5 // pred_fallthru
        _
      %p196 = scmp.lt.s32.totalorder %s22, 12
      // Predicated region
      $region13: #{tpu_custom_call.1} parent=5 // pred_check
        %p197 = pneg %p196
      $region14: #{tpu_custom_call.1} parent=5 // pred_check_branch
        %199 = sbr.rel (%p197) target = $region16
      $region15: #{tpu_custom_call.1} parent=5 // pred_region
        // Predicated region
        $region17: #{tpu_custom_call.1} parent=15 // pred_check
          %p200 = pneg %p63
        $region18: #{tpu_custom_call.1} parent=15 // pred_check_branch
          %202 = sbr.rel (%p200) target = $region20
        $region19: #{tpu_custom_call.1} parent=15 // pred_region
          %s203 = sand.u32 %s53, 1
          %s204 = scalar_lea.sflag [#allocation3], %s203
          %s205 = sand.u32 %s53, 1
          %s206 = smul.addr %s205, 128
          %s207 = scalar_lea.vmem [#allocation2], %s206
          %s208 = smul.u32 16, %s30
          %s210 = ssub.s32 2048, 2048
          %211 = vsyncadd %s204, %s210
          %s212 = smul.addr %s208, 2
          %s213 = smul.addr %s29, 64
          %s214 = sadd.s32 %s212, %s213
          %s215 = smul.addr %s214, 64
          %s216 = scalar_lea.hbm %s0, %s215
          %s217 = sshll.u32 %s207, 4
          %s218 = int_to_ptr.vmem [resolvable:$true] %s217
          %223 = dma.hbm_to_vmem [thread:$0]  %s216, 2048, %s218, %s204, 128, 128, 8
        $region20: #{tpu_custom_call.1} parent=15 // pred_fallthru
          _
        // Predicated region
        $region21: #{tpu_custom_call.1} parent=15 // pred_check
          %p224 = pneg %p89
        $region22: #{tpu_custom_call.1} parent=15 // pred_check_branch
          %226 = sbr.rel (%p224) target = $region24
        $region23: #{tpu_custom_call.1} parent=15 // pred_region
          %s227 = sand.u32 %s22, 1
          %s228 = scalar_lea.sflag [#allocation6], %s227
          %s229 = sand.u32 %s79, 1
          %s230 = smul.addr %s229, 256
          %s231 = scalar_lea.vmem [#allocation5], %s230
          %s233 = ssub.s32 4096, 4096
          %234 = vsyncadd %s228, %s233
          %s235 = smul.addr %s31, 64
          %s236 = smul.addr %s235, 64
          %s237 = scalar_lea.hbm %s1, %s236
          %s238 = sshll.u32 %s231, 4
          %s239 = int_to_ptr.vmem [resolvable:$true] %s238
          %244 = dma.hbm_to_vmem [thread:$0]  %s237, 4096, %s239, %s228, 128, 128, 8
        $region24: #{tpu_custom_call.1} parent=15 // pred_fallthru
          _
        // Predicated region
        $region25: #{tpu_custom_call.1} parent=15 // pred_check
          %p245 = pneg %p117
        $region26: #{tpu_custom_call.1} parent=15 // pred_check_branch
          %247 = sbr.rel (%p245) target = $region28
        $region27: #{tpu_custom_call.1} parent=15 // pred_region
          %s248 = sand.u32 %s22, 1
          %s249 = scalar_lea.sflag [#allocation6], %s248
          %s250 = sand.u32 %s107, 1
          %s251 = smul.addr %s250, 64
          %s252 = scalar_lea.vmem [#allocation7], %s251
          %s253 = smul.u32 16, %s30
          %s255 = ssub.s32 1024, 1024
          %256 = vsyncadd %s249, %s255
          %s257 = smul.addr %s29, 32
          %s258 = sadd.s32 %s253, %s257
          %s259 = smul.addr %s258, 64
          %s260 = scalar_lea.hbm %s2, %s259
          %s261 = sshll.u32 %s252, 4
          %s262 = int_to_ptr.vmem [resolvable:$true] %s261
          %267 = dma.hbm_to_vmem [thread:$0]  %s260, 1024, %s262, %s249, 64, 64, 4
        $region28: #{tpu_custom_call.1} parent=15 // pred_fallthru
          _
        // Predicated region
        $region29: #{tpu_custom_call.1} parent=15 // pred_check
          %p268 = pneg %p145
        $region30: #{tpu_custom_call.1} parent=15 // pred_check_branch
          %270 = sbr.rel (%p268) target = $region32
        $region31: #{tpu_custom_call.1} parent=15 // pred_region
          %s271 = sand.u32 %s135, 1
          %s272 = scalar_lea.sflag [#allocation9], %s271
          %s273 = sand.u32 %s135, 1
          %s274 = smul.addr %s273, 64
          %s275 = scalar_lea.vmem [#allocation8], %s274
          %s276 = smul.u32 16, %s30
          %s278 = ssub.s32 1024, 1024
          %279 = vsyncadd %s272, %s278
          %s280 = smul.addr %s29, 32
          %s281 = sadd.s32 %s276, %s280
          %s282 = smul.addr %s281, 64
          %s283 = scalar_lea.hbm %s3, %s282
          %s284 = sshll.u32 %s275, 4
          %s285 = int_to_ptr.vmem [resolvable:$true] %s284
          %290 = dma.hbm_to_vmem [thread:$0]  %s283, 1024, %s285, %s272, 64, 64, 4
        $region32: #{tpu_custom_call.1} parent=15 // pred_fallthru
          _
      $region16: #{tpu_custom_call.1} parent=5 // pred_fallthru
        _
      %p291 = scmp.le.s32.totalorder 1, %s22
      %p292 = scmp.lt.s32.totalorder %s22, 13
      %p293 = pnand %p291, %p292
      %p294 = pneg %p293
      // Predicated region
      $region33: #{tpu_custom_call.1} parent=5 // pred_check
        _
      $region34: #{tpu_custom_call.1} parent=5 // pred_check_branch
        %296 = sbr.rel (%p293) target = $region36
      $region35: #{tpu_custom_call.1} parent=5 // pred_region
        %s297 = ssub.s32 %s22, 1
        %s298 = sand.u32 %s56, 1
        %s299 = scalar_lea.sflag [#allocation3], %s298
        %s300 = sand.u32 %s56, 1
        %s301 = smul.addr %s300, 128
        %s302 = scalar_lea.vmem [#allocation2], %s301
        // Predicated region
        $region37: #{tpu_custom_call.1} parent=35 // pred_check
          %p303 = pneg %p69
        $region38: #{tpu_custom_call.1} parent=35 // pred_check_branch
          %305 = sbr.rel (%p303) target = $region40
        $region39: #{tpu_custom_call.1} parent=35 // pred_region
          %306 = dma.done %s299, 2048
        $region40: #{tpu_custom_call.1} parent=35 // pred_fallthru
          _
        %s307 = sand.u32 %s27, 1
        %s308 = scalar_lea.sflag [#allocation6], %s307
        %s309 = sand.u32 %s82, 1
        %s310 = smul.addr %s309, 256
        %s311 = scalar_lea.vmem [#allocation5], %s310
        // Predicated region
        $region41: #{tpu_custom_call.1} parent=35 // pred_check
          %p312 = pneg %p95
        $region42: #{tpu_custom_call.1} parent=35 // pred_check_branch
          %314 = sbr.rel (%p312) target = $region44
        $region43: #{tpu_custom_call.1} parent=35 // pred_region
          %315 = dma.done %s308, 4096
        $region44: #{tpu_custom_call.1} parent=35 // pred_fallthru
          _
        %s316 = sand.u32 %s27, 1
        %s317 = scalar_lea.sflag [#allocation6], %s316
        %s318 = sand.u32 %s110, 1
        %s319 = smul.addr %s318, 64
        %s320 = scalar_lea.vmem [#allocation7], %s319
        // Predicated region
        $region45: #{tpu_custom_call.1} parent=35 // pred_check
          %p321 = pneg %p123
        $region46: #{tpu_custom_call.1} parent=35 // pred_check_branch
          %323 = sbr.rel (%p321) target = $region48
        $region47: #{tpu_custom_call.1} parent=35 // pred_region
          %324 = dma.done %s317, 1024
        $region48: #{tpu_custom_call.1} parent=35 // pred_fallthru
          _
        %s325 = sand.u32 %s138, 1
        %s326 = scalar_lea.sflag [#allocation9], %s325
        %s327 = sand.u32 %s138, 1
        %s328 = smul.addr %s327, 64
        %s329 = scalar_lea.vmem [#allocation8], %s328
        // Predicated region
        $region49: #{tpu_custom_call.1} parent=35 // pred_check
          %p330 = pneg %p151
        $region50: #{tpu_custom_call.1} parent=35 // pred_check_branch
          %332 = sbr.rel (%p330) target = $region52
        $region51: #{tpu_custom_call.1} parent=35 // pred_region
          %333 = dma.done %s326, 1024
        $region52: #{tpu_custom_call.1} parent=35 // pred_fallthru
          _
        %s334 = sand.u32 %s56, 1
        %s335 = scalar_lea.sflag [#allocation3], %s334
        %s336 = sand.u32 %s56, 1
        %s337 = smul.addr %s336, 128
        %s338 = scalar_lea.vmem [#allocation2], %s337
        %p339 = pneg %p69
        %p340 = pneg %p66
        %s341 = sand.u32 %s27, 1
        %s342 = scalar_lea.sflag [#allocation6], %s341
        %s343 = sand.u32 %s82, 1
        %s344 = smul.addr %s343, 256
        %s345 = scalar_lea.vmem [#allocation5], %s344
        %p346 = pneg %p95
        %p347 = pneg %p92
        %s348 = sand.u32 %s27, 1
        %s349 = scalar_lea.sflag [#allocation6], %s348
        %s350 = sand.u32 %s110, 1
        %s351 = smul.addr %s350, 64
        %s352 = scalar_lea.vmem [#allocation7], %s351
        %p353 = pneg %p123
        %p354 = pneg %p120
        %s355 = sand.u32 %s138, 1
        %s356 = scalar_lea.sflag [#allocation9], %s355
        %s357 = sand.u32 %s138, 1
        %s358 = smul.addr %s357, 64
        %s359 = scalar_lea.vmem [#allocation8], %s358
        %p360 = pneg %p151
        %p361 = pneg %p148
        %p362 = pneg %p181
        %p363 = pneg %p178
        %s364 = sand.u32 %s168, 1
        %s365 = scalar_lea.sflag [#allocation4], %s364
        %s366 = sand.u32 %s168, 1
        %s367 = smul.addr %s366, 128
        %s368 = scalar_lea.vmem [#allocation10], %s367
        %s369 = smul.u32 16, %s33
        %s370 = smul.u32 16, %s33
        %s371 = smul.u32 16, %s33
        %s372 = smul.u32 2, %s34
        %s373 = smul.u32 16, %s33
        %v374 = vld [vmem:[%s302] sm:$0xff]
        %v375 = vld [vmem:[%s302 + $0x8] sm:$0xff]
        %v376 = vld [vmem:[%s302 + $0x10] sm:$0xff]
        %v377 = vld [vmem:[%s302 + $0x18] sm:$0xff]
        %v378 = vld [vmem:[%s302 + $0x20] sm:$0xff]
        %v379 = vld [vmem:[%s302 + $0x28] sm:$0xff]
        %v380 = vld [vmem:[%s302 + $0x30] sm:$0xff]
        %v381 = vld [vmem:[%s302 + $0x38] sm:$0xff]
        %v382 = vld [vmem:[%s302 + $0x40] sm:$0xff]
        %v383 = vld [vmem:[%s302 + $0x48] sm:$0xff]
        %v384 = vld [vmem:[%s302 + $0x50] sm:$0xff]
        %v385 = vld [vmem:[%s302 + $0x58] sm:$0xff]
        %v386 = vld [vmem:[%s302 + $0x60] sm:$0xff]
        %v387 = vld [vmem:[%s302 + $0x68] sm:$0xff]
        %v388 = vld [vmem:[%s302 + $0x70] sm:$0xff]
        %v389 = vld [vmem:[%s302 + $0x78] sm:$0xff]
        %v390 = vld [vmem:[%s311] sm:$0xff]
        %v391 = vld [vmem:[%s311 + $0x8] sm:$0xff]
        %v392 = vld [vmem:[%s311 + $0x10] sm:$0xff]
        %v393 = vld [vmem:[%s311 + $0x18] sm:$0xff]
        %v394 = vld [vmem:[%s311 + $0x20] sm:$0xff]
        %v395 = vld [vmem:[%s311 + $0x28] sm:$0xff]
        %v396 = vld [vmem:[%s311 + $0x30] sm:$0xff]
        %v397 = vld [vmem:[%s311 + $0x38] sm:$0xff]
        %v398 = vld [vmem:[%s311 + $0x40] sm:$0xff]
        %v399 = vld [vmem:[%s311 + $0x48] sm:$0xff]
        %v400 = vld [vmem:[%s311 + $0x50] sm:$0xff]
        %v401 = vld [vmem:[%s311 + $0x58] sm:$0xff]
        %v402 = vld [vmem:[%s311 + $0x60] sm:$0xff]
        %v403 = vld [vmem:[%s311 + $0x68] sm:$0xff]
        %v404 = vld [vmem:[%s311 + $0x70] sm:$0xff]
        %v405 = vld [vmem:[%s311 + $0x78] sm:$0xff]
        %v406 = vld [vmem:[%s311 + $0x80] sm:$0xff]
        %v407 = vld [vmem:[%s311 + $0x88] sm:$0xff]
        %v408 = vld [vmem:[%s311 + $0x90] sm:$0xff]
        %v409 = vld [vmem:[%s311 + $0x98] sm:$0xff]
        %v410 = vld [vmem:[%s311 + $0xa0] sm:$0xff]
        %v411 = vld [vmem:[%s311 + $0xa8] sm:$0xff]
        %v412 = vld [vmem:[%s311 + $0xb0] sm:$0xff]
        %v413 = vld [vmem:[%s311 + $0xb8] sm:$0xff]
        %v414 = vld [vmem:[%s311 + $0xc0] sm:$0xff]
        %v415 = vld [vmem:[%s311 + $0xc8] sm:$0xff]
        %v416 = vld [vmem:[%s311 + $0xd0] sm:$0xff]
        %v417 = vld [vmem:[%s311 + $0xd8] sm:$0xff]
        %v418 = vld [vmem:[%s311 + $0xe0] sm:$0xff]
        %v419 = vld [vmem:[%s311 + $0xe8] sm:$0xff]
        %v420 = vld [vmem:[%s311 + $0xf0] sm:$0xff]
        %v421 = vld [vmem:[%s311 + $0xf8] sm:$0xff]
        %v438 = vunpack.c.l.b16 %v374
        %v439 = vunpack.c.h.b16 %v374
        %v440 = vunpack.c.l.b16 %v375
        %v441 = vunpack.c.h.b16 %v375
        %v442 = vunpack.c.l.b16 %v376
        %v443 = vunpack.c.h.b16 %v376
        %v444 = vunpack.c.l.b16 %v377
        %v445 = vunpack.c.h.b16 %v377
        %v446 = vunpack.c.l.b16 %v378
        %v447 = vunpack.c.h.b16 %v378
        %v448 = vunpack.c.l.b16 %v379
        %v449 = vunpack.c.h.b16 %v379
        %v450 = vunpack.c.l.b16 %v380
        %v451 = vunpack.c.h.b16 %v380
        %v452 = vunpack.c.l.b16 %v381
        %v453 = vunpack.c.h.b16 %v381
        %v454 = vunpack.c.l.b16 %v382
        %v455 = vunpack.c.h.b16 %v382
        %v456 = vunpack.c.l.b16 %v383
        %v457 = vunpack.c.h.b16 %v383
        %v458 = vunpack.c.l.b16 %v384
        %v459 = vunpack.c.h.b16 %v384
        %v460 = vunpack.c.l.b16 %v385
        %v461 = vunpack.c.h.b16 %v385
        %v462 = vunpack.c.l.b16 %v386
        %v463 = vunpack.c.h.b16 %v386
        %v464 = vunpack.c.l.b16 %v387
        %v465 = vunpack.c.h.b16 %v387
        %v466 = vunpack.c.l.b16 %v388
        %v467 = vunpack.c.h.b16 %v388
        %v468 = vunpack.c.l.b16 %v389
        %v469 = vunpack.c.h.b16 %v389
        %v470 = vpack.c.b16 %v440, %v438
        %v471 = vpack.c.b16 %v441, %v439
        %v472 = vpack.c.b16 %v444, %v442
        %v473 = vpack.c.b16 %v445, %v443
        %v474 = vpack.c.b16 %v448, %v446
        %v475 = vpack.c.b16 %v449, %v447
        %v476 = vpack.c.b16 %v452, %v450
        %v477 = vpack.c.b16 %v453, %v451
        %v478 = vpack.c.b16 %v456, %v454
        %v479 = vpack.c.b16 %v457, %v455
        %v480 = vpack.c.b16 %v460, %v458
        %v481 = vpack.c.b16 %v461, %v459
        %v482 = vpack.c.b16 %v464, %v462
        %v483 = vpack.c.b16 %v465, %v463
        %v484 = vpack.c.b16 %v468, %v466
        %v485 = vpack.c.b16 %v469, %v467
        %v534 = vunpack.c.l.b16 %v390
        %v535 = vunpack.c.h.b16 %v390
        %v536 = vunpack.c.l.b16 %v391
        %v537 = vunpack.c.h.b16 %v391
        %v538 = vunpack.c.l.b16 %v392
        %v539 = vunpack.c.h.b16 %v392
        %v540 = vunpack.c.l.b16 %v393
        %v541 = vunpack.c.h.b16 %v393
        %v542 = vunpack.c.l.b16 %v394
        %v543 = vunpack.c.h.b16 %v394
        %v544 = vunpack.c.l.b16 %v395
        %v545 = vunpack.c.h.b16 %v395
        %v546 = vunpack.c.l.b16 %v396
        %v547 = vunpack.c.h.b16 %v396
        %v548 = vunpack.c.l.b16 %v397
        %v549 = vunpack.c.h.b16 %v397
        %v550 = vunpack.c.l.b16 %v398
        %v551 = vunpack.c.h.b16 %v398
        %v552 = vunpack.c.l.b16 %v399
        %v553 = vunpack.c.h.b16 %v399
        %v554 = vunpack.c.l.b16 %v400
        %v555 = vunpack.c.h.b16 %v400
        %v556 = vunpack.c.l.b16 %v401
        %v557 = vunpack.c.h.b16 %v401
        %v558 = vunpack.c.l.b16 %v402
        %v559 = vunpack.c.h.b16 %v402
        %v560 = vunpack.c.l.b16 %v403
        %v561 = vunpack.c.h.b16 %v403
        %v562 = vunpack.c.l.b16 %v404
        %v563 = vunpack.c.h.b16 %v404
        %v564 = vunpack.c.l.b16 %v405
        %v565 = vunpack.c.h.b16 %v405
        %v566 = vunpack.c.l.b16 %v406
        %v567 = vunpack.c.h.b16 %v406
        %v568 = vunpack.c.l.b16 %v407
        %v569 = vunpack.c.h.b16 %v407
        %v570 = vunpack.c.l.b16 %v408
        %v571 = vunpack.c.h.b16 %v408
        %v572 = vunpack.c.l.b16 %v409
        %v573 = vunpack.c.h.b16 %v409
        %v574 = vunpack.c.l.b16 %v410
        %v575 = vunpack.c.h.b16 %v410
        %v576 = vunpack.c.l.b16 %v411
        %v577 = vunpack.c.h.b16 %v411
        %v578 = vunpack.c.l.b16 %v412
        %v579 = vunpack.c.h.b16 %v412
        %v580 = vunpack.c.l.b16 %v413
        %v581 = vunpack.c.h.b16 %v413
        %v582 = vunpack.c.l.b16 %v414
        %v583 = vunpack.c.h.b16 %v414
        %v584 = vunpack.c.l.b16 %v415
        %v585 = vunpack.c.h.b16 %v415
        %v586 = vunpack.c.l.b16 %v416
        %v587 = vunpack.c.h.b16 %v416
        %v588 = vunpack.c.l.b16 %v417
        %v589 = vunpack.c.h.b16 %v417
        %v590 = vunpack.c.l.b16 %v418
        %v591 = vunpack.c.h.b16 %v418
        %v592 = vunpack.c.l.b16 %v419
        %v593 = vunpack.c.h.b16 %v419
        %v594 = vunpack.c.l.b16 %v420
        %v595 = vunpack.c.h.b16 %v420
        %v596 = vunpack.c.l.b16 %v421
        %v597 = vunpack.c.h.b16 %v421
        %v598 = vpack.c.b16 %v536, %v534
        %v599 = vpack.c.b16 %v537, %v535
        %v600 = vpack.c.b16 %v540, %v538
        %v601 = vpack.c.b16 %v541, %v539
        %v602 = vpack.c.b16 %v544, %v542
        %v603 = vpack.c.b16 %v545, %v543
        %v604 = vpack.c.b16 %v548, %v546
        %v605 = vpack.c.b16 %v549, %v547
        %v606 = vpack.c.b16 %v552, %v550
        %v607 = vpack.c.b16 %v553, %v551
        %v608 = vpack.c.b16 %v556, %v554
        %v609 = vpack.c.b16 %v557, %v555
        %v610 = vpack.c.b16 %v560, %v558
        %v611 = vpack.c.b16 %v561, %v559
        %v612 = vpack.c.b16 %v564, %v562
        %v613 = vpack.c.b16 %v565, %v563
        %v614 = vpack.c.b16 %v568, %v566
        %v615 = vpack.c.b16 %v569, %v567
        %v616 = vpack.c.b16 %v572, %v570
        %v617 = vpack.c.b16 %v573, %v571
        %v618 = vpack.c.b16 %v576, %v574
        %v619 = vpack.c.b16 %v577, %v575
        %v620 = vpack.c.b16 %v580, %v578
        %v621 = vpack.c.b16 %v581, %v579
        %v622 = vpack.c.b16 %v584, %v582
        %v623 = vpack.c.b16 %v585, %v583
        %v624 = vpack.c.b16 %v588, %v586
        %v625 = vpack.c.b16 %v589, %v587
        %v626 = vpack.c.b16 %v592, %v590
        %v627 = vpack.c.b16 %v593, %v591
        %v628 = vpack.c.b16 %v596, %v594
        %v629 = vpack.c.b16 %v597, %v595
        %662 = vmatprep.subr.bf16.mxu0 %v599
        %663 = vmatpush1.bf16.xpose.msra.mxu0 %v598
        %664 = vmatprep.subr.bf16.mxu0 %v601
        %665 = vmatpush1.bf16.xpose.msra.mxu0 %v600
        %666 = vmatprep.subr.bf16.mxu0 %v603
        %667 = vmatpush1.bf16.xpose.msra.mxu0 %v602
        %668 = vmatprep.subr.bf16.mxu0 %v605
        %669 = vmatpush1.bf16.xpose.msra.mxu0 %v604
        %670 = vmatprep.subr.bf16.mxu0 %v607
        %671 = vmatpush1.bf16.xpose.msra.mxu0 %v606
        %672 = vmatprep.subr.bf16.mxu0 %v609
        %673 = vmatpush1.bf16.xpose.msra.mxu0 %v608
        %674 = vmatprep.subr.bf16.mxu0 %v611
        %675 = vmatpush1.bf16.xpose.msra.mxu0 %v610
        %676 = vmatprep.subr.bf16.mxu0 %v613
        %677 = vmatpush1.bf16.xpose.msra.mxu0 %v612
        %678 = vmatprep.subr.bf16.mxu0 %v615
        %679 = vmatpush1.bf16.xpose.msra.mxu0 %v614
        %680 = vmatprep.subr.bf16.mxu0 %v617
        %681 = vmatpush1.bf16.xpose.msra.mxu0 %v616
        %682 = vmatprep.subr.bf16.mxu0 %v619
        %683 = vmatpush1.bf16.xpose.msra.mxu0 %v618
        %684 = vmatprep.subr.bf16.mxu0 %v621
        %685 = vmatpush1.bf16.xpose.msra.mxu0 %v620
        %686 = vmatprep.subr.bf16.mxu0 %v623
        %687 = vmatpush1.bf16.xpose.msra.mxu0 %v622
        %688 = vmatprep.subr.bf16.mxu0 %v625
        %689 = vmatpush1.bf16.xpose.msra.mxu0 %v624
        %690 = vmatprep.subr.bf16.mxu0 %v627
        %691 = vmatpush1.bf16.xpose.msra.mxu0 %v626
        %692 = vmatprep.subr.bf16.mxu0 %v629
        %693 = vmatpush1.bf16.xpose.msra.mxu0 %v628
        %694 = vmatprep.mubr.bf16.mxu0 %v471
        %695 = vmatmul.mubr.bf16.gmra.mrb[0].mxu0 %v470
        %v696 = vpop.f32.mrb[0].mxu0
        %v697 = vadd.f32 0.0, %v696
        %v698 = vpop.f32.mrb[0].mxu0
        %v699 = vadd.f32 0.0, %v698
        %v700 = vpop.f32.mrb[0].mxu0
        %v701 = vadd.f32 0.0, %v700
        %v702 = vpop.f32.mrb[0].mxu0
        %v703 = vadd.f32 0.0, %v702
        %704 = vmatprep.mubr.bf16.mxu0 %v473
        %705 = vmatmul.mubr.bf16.gmra.mrb[0].mxu0 %v472
        %v706 = vpop.f32.mrb[0].mxu0
        %v707 = vadd.f32 0.0, %v706
        %v708 = vpop.f32.mrb[0].mxu0
        %v709 = vadd.f32 0.0, %v708
        %v710 = vpop.f32.mrb[0].mxu0
        %v711 = vadd.f32 0.0, %v710
        %v712 = vpop.f32.mrb[0].mxu0
        %v713 = vadd.f32 0.0, %v712
        %714 = vmatprep.mubr.bf16.mxu0 %v475
        %715 = vmatmul.mubr.bf16.gmra.mrb[0].mxu0 %v474
        %v716 = vpop.f32.mrb[0].mxu0
        %v717 = vadd.f32 0.0, %v716
        %v718 = vpop.f32.mrb[0].mxu0
        %v719 = vadd.f32 0.0, %v718
        %v720 = vpop.f32.mrb[0].mxu0
        %v721 = vadd.f32 0.0, %v720
        %v722 = vpop.f32.mrb[0].mxu0
        %v723 = vadd.f32 0.0, %v722
        %724 = vmatprep.mubr.bf16.mxu0 %v477
        %725 = vmatmul.mubr.bf16.gmra.mrb[0].mxu0 %v476
        %v726 = vpop.f32.mrb[0].mxu0
        %v727 = vadd.f32 0.0, %v726
        %v728 = vpop.f32.mrb[0].mxu0
        %v729 = vadd.f32 0.0, %v728
        %v730 = vpop.f32.mrb[0].mxu0
        %v731 = vadd.f32 0.0, %v730
        %v732 = vpop.f32.mrb[0].mxu0
        %v733 = vadd.f32 0.0, %v732
        %734 = vmatprep.mubr.bf16.mxu0 %v479
        %735 = vmatmul.mubr.bf16.gmra.mrb[0].mxu0 %v478
        %v736 = vpop.f32.mrb[0].mxu0
        %v737 = vadd.f32 0.0, %v736
        %v738 = vpop.f32.mrb[0].mxu0
        %v739 = vadd.f32 0.0, %v738
        %v740 = vpop.f32.mrb[0].mxu0
        %v741 = vadd.f32 0.0, %v740
        %v742 = vpop.f32.mrb[0].mxu0
        %v743 = vadd.f32 0.0, %v742
        %744 = vmatprep.mubr.bf16.mxu0 %v481
        %745 = vmatmul.mubr.bf16.gmra.mrb[0].mxu0 %v480
        %v746 = vpop.f32.mrb[0].mxu0
        %v747 = vadd.f32 0.0, %v746
        %v748 = vpop.f32.mrb[0].mxu0
        %v749 = vadd.f32 0.0, %v748
        %v750 = vpop.f32.mrb[0].mxu0
        %v751 = vadd.f32 0.0, %v750
        %v752 = vpop.f32.mrb[0].mxu0
        %v753 = vadd.f32 0.0, %v752
        %754 = vmatprep.mubr.bf16.mxu0 %v483
        %755 = vmatmul.mubr.bf16.gmra.mrb[0].mxu0 %v482
        %v756 = vpop.f32.mrb[0].mxu0
        %v757 = vadd.f32 0.0, %v756
        %v758 = vpop.f32.mrb[0].mxu0
        %v759 = vadd.f32 0.0, %v758
        %v760 = vpop.f32.mrb[0].mxu0
        %v761 = vadd.f32 0.0, %v760
        %v762 = vpop.f32.mrb[0].mxu0
        %v763 = vadd.f32 0.0, %v762
        %764 = vmatprep.mubr.bf16.mxu0 %v485
        %765 = vmatmul.mubr.bf16.gmra.mrb[0].mxu0 %v484
        %v766 = vpop.f32.mrb[0].mxu0
        %v767 = vadd.f32 0.0, %v766
        %v768 = vpop.f32.mrb[0].mxu0
        %v769 = vadd.f32 0.0, %v768
        %v770 = vpop.f32.mrb[0].mxu0
        %v771 = vadd.f32 0.0, %v770
        %v772 = vpop.f32.mrb[0].mxu0
        %v773 = vadd.f32 0.0, %v772
        %774 = vdwg.mxu0
        %v775 = vld [vmem:[%s320] sm:$0xf]
        %v776 = vld [vmem:[%s320 + $0x4] sm:$0xf]
        %v777 = vld [vmem:[%s320 + $0x8] sm:$0xf]
        %v778 = vld [vmem:[%s320 + $0xc] sm:$0xf]
        %v779 = vld [vmem:[%s320 + $0x10] sm:$0xf]
        %v780 = vld [vmem:[%s320 + $0x14] sm:$0xf]
        %v781 = vld [vmem:[%s320 + $0x18] sm:$0xf]
        %v782 = vld [vmem:[%s320 + $0x1c] sm:$0xf]
        %v783 = vld [vmem:[%s320 + $0x20] sm:$0xf]
        %v784 = vld [vmem:[%s320 + $0x24] sm:$0xf]
        %v785 = vld [vmem:[%s320 + $0x28] sm:$0xf]
        %v786 = vld [vmem:[%s320 + $0x2c] sm:$0xf]
        %v787 = vld [vmem:[%s320 + $0x30] sm:$0xf]
        %v788 = vld [vmem:[%s320 + $0x34] sm:$0xf]
        %v789 = vld [vmem:[%s320 + $0x38] sm:$0xf]
        %v790 = vld [vmem:[%s320 + $0x3c] sm:$0xf]
        %v791 = vunpack.c.l.bf16 %v775
        %v792 = vunpack.c.l.bf16 %v776
        %v793 = vunpack.c.l.bf16 %v777
        %v794 = vunpack.c.l.bf16 %v778
        %v795 = vunpack.c.l.bf16 %v779
        %v796 = vunpack.c.l.bf16 %v780
        %v797 = vunpack.c.l.bf16 %v781
        %v798 = vunpack.c.l.bf16 %v782
        %v799 = vunpack.c.l.bf16 %v783
        %v800 = vunpack.c.l.bf16 %v784
        %v801 = vunpack.c.l.bf16 %v785
        %v802 = vunpack.c.l.bf16 %v786
        %v803 = vunpack.c.l.bf16 %v787
        %v804 = vunpack.c.l.bf16 %v788
        %v805 = vunpack.c.l.bf16 %v789
        %v806 = vunpack.c.l.bf16 %v790
        %v807 = vld [vmem:[%s329] sm:$0xf]
        %v808 = vld [vmem:[%s329 + $0x4] sm:$0xf]
        %v809 = vld [vmem:[%s329 + $0x8] sm:$0xf]
        %v810 = vld [vmem:[%s329 + $0xc] sm:$0xf]
        %v811 = vld [vmem:[%s329 + $0x10] sm:$0xf]
        %v812 = vld [vmem:[%s329 + $0x14] sm:$0xf]
        %v813 = vld [vmem:[%s329 + $0x18] sm:$0xf]
        %v814 = vld [vmem:[%s329 + $0x1c] sm:$0xf]
        %v815 = vld [vmem:[%s329 + $0x20] sm:$0xf]
        %v816 = vld [vmem:[%s329 + $0x24] sm:$0xf]
        %v817 = vld [vmem:[%s329 + $0x28] sm:$0xf]
        %v818 = vld [vmem:[%s329 + $0x2c] sm:$0xf]
        %v819 = vld [vmem:[%s329 + $0x30] sm:$0xf]
        %v820 = vld [vmem:[%s329 + $0x34] sm:$0xf]
        %v821 = vld [vmem:[%s329 + $0x38] sm:$0xf]
        %v822 = vld [vmem:[%s329 + $0x3c] sm:$0xf]
        %v823 = vunpack.c.l.bf16 %v807
        %v824 = vunpack.c.l.bf16 %v808
        %v825 = vunpack.c.l.bf16 %v809
        %v826 = vunpack.c.l.bf16 %v810
        %v827 = vunpack.c.l.bf16 %v811
        %v828 = vunpack.c.l.bf16 %v812
        %v829 = vunpack.c.l.bf16 %v813
        %v830 = vunpack.c.l.bf16 %v814
        %v831 = vunpack.c.l.bf16 %v815
        %v832 = vunpack.c.l.bf16 %v816
        %v833 = vunpack.c.l.bf16 %v817
        %v834 = vunpack.c.l.bf16 %v818
        %v835 = vunpack.c.l.bf16 %v819
        %v836 = vunpack.c.l.bf16 %v820
        %v837 = vunpack.c.l.bf16 %v821
        %v838 = vunpack.c.l.bf16 %v822
        %v839 = vmul.f32 %v697, %v791
        %v840 = vmul.f32 %v701, %v792
        %v841 = vmul.f32 %v707, %v793
        %v842 = vmul.f32 %v711, %v794
        %v843 = vmul.f32 %v717, %v795
        %v844 = vmul.f32 %v721, %v796
        %v845 = vmul.f32 %v727, %v797
        %v846 = vmul.f32 %v731, %v798
        %v847 = vmul.f32 %v737, %v799
        %v848 = vmul.f32 %v741, %v800
        %v849 = vmul.f32 %v747, %v801
        %v850 = vmul.f32 %v751, %v802
        %v851 = vmul.f32 %v757, %v803
        %v852 = vmul.f32 %v761, %v804
        %v853 = vmul.f32 %v767, %v805
        %v854 = vmul.f32 %v771, %v806
        %855 = vrot.lane.b32.xlu0 %v697, 64
        %v856 = vpop.permute.xlu0 %855
        %857 = vrot.lane.b32.xlu0 %v701, 64
        %v858 = vpop.permute.xlu0 %857
        %859 = vrot.lane.b32.xlu0 %v707, 64
        %v860 = vpop.permute.xlu0 %859
        %861 = vrot.lane.b32.xlu0 %v711, 64
        %v862 = vpop.permute.xlu0 %861
        %863 = vrot.lane.b32.xlu0 %v717, 64
        %v864 = vpop.permute.xlu0 %863
        %865 = vrot.lane.b32.xlu0 %v721, 64
        %v866 = vpop.permute.xlu0 %865
        %867 = vrot.lane.b32.xlu0 %v727, 64
        %v868 = vpop.permute.xlu0 %867
        %869 = vrot.lane.b32.xlu0 %v731, 64
        %v870 = vpop.permute.xlu0 %869
        %871 = vrot.lane.b32.xlu0 %v737, 64
        %v872 = vpop.permute.xlu0 %871
        %873 = vrot.lane.b32.xlu0 %v741, 64
        %v874 = vpop.permute.xlu0 %873
        %875 = vrot.lane.b32.xlu0 %v747, 64
        %v876 = vpop.permute.xlu0 %875
        %877 = vrot.lane.b32.xlu0 %v751, 64
        %v878 = vpop.permute.xlu0 %877
        %879 = vrot.lane.b32.xlu0 %v757, 64
        %v880 = vpop.permute.xlu0 %879
        %881 = vrot.lane.b32.xlu0 %v761, 64
        %v882 = vpop.permute.xlu0 %881
        %883 = vrot.lane.b32.xlu0 %v767, 64
        %v884 = vpop.permute.xlu0 %883
        %885 = vrot.lane.b32.xlu0 %v771, 64
        %v886 = vpop.permute.xlu0 %885
        %v887 = vmul.f32 %v856, %v823
        %v888 = vmul.f32 %v858, %v824
        %v889 = vmul.f32 %v860, %v825
        %v890 = vmul.f32 %v862, %v826
        %v891 = vmul.f32 %v864, %v827
        %v892 = vmul.f32 %v866, %v828
        %v893 = vmul.f32 %v868, %v829
        %v894 = vmul.f32 %v870, %v830
        %v895 = vmul.f32 %v872, %v831
        %v896 = vmul.f32 %v874, %v832
        %v897 = vmul.f32 %v876, %v833
        %v898 = vmul.f32 %v878, %v834
        %v899 = vmul.f32 %v880, %v835
        %v900 = vmul.f32 %v882, %v836
        %v901 = vmul.f32 %v884, %v837
        %v902 = vmul.f32 %v886, %v838
        %v903 = vadd.f32 %v839, %v887
        %v904 = vadd.f32 %v840, %v888
        %v905 = vadd.f32 %v841, %v889
        %v906 = vadd.f32 %v842, %v890
        %v907 = vadd.f32 %v843, %v891
        %v908 = vadd.f32 %v844, %v892
        %v909 = vadd.f32 %v845, %v893
        %v910 = vadd.f32 %v846, %v894
        %v911 = vadd.f32 %v847, %v895
        %v912 = vadd.f32 %v848, %v896
        %v913 = vadd.f32 %v849, %v897
        %v914 = vadd.f32 %v850, %v898
        %v915 = vadd.f32 %v851, %v899
        %v916 = vadd.f32 %v852, %v900
        %v917 = vadd.f32 %v853, %v901
        %v918 = vadd.f32 %v854, %v902
        %v919 = vpack.c.bf16 %v904, %v903
        %v920 = vpack.c.bf16 %v906, %v905
        %v921 = vpack.c.bf16 %v908, %v907
        %v922 = vpack.c.bf16 %v910, %v909
        %v923 = vpack.c.bf16 %v912, %v911
        %v924 = vpack.c.bf16 %v914, %v913
        %v925 = vpack.c.bf16 %v916, %v915
        %v926 = vpack.c.bf16 %v918, %v917
        %v935 = vunpack.c.l.b16 %v919
        %v936 = vunpack.c.h.b16 %v919
        %v937 = vunpack.c.l.b16 %v920
        %v938 = vunpack.c.h.b16 %v920
        %v939 = vunpack.c.l.b16 %v921
        %v940 = vunpack.c.h.b16 %v921
        %v941 = vunpack.c.l.b16 %v922
        %v942 = vunpack.c.h.b16 %v922
        %v943 = vunpack.c.l.b16 %v923
        %v944 = vunpack.c.h.b16 %v923
        %v945 = vunpack.c.l.b16 %v924
        %v946 = vunpack.c.h.b16 %v924
        %v947 = vunpack.c.l.b16 %v925
        %v948 = vunpack.c.h.b16 %v925
        %v949 = vunpack.c.l.b16 %v926
        %v950 = vunpack.c.h.b16 %v926
        %v951 = vpack.c.b16 %v935, %v935
        %v952 = vpack.c.b16 %v936, %v936
        %v953 = vpack.c.b16 %v937, %v937
        %v954 = vpack.c.b16 %v938, %v938
        %v955 = vpack.c.b16 %v939, %v939
        %v956 = vpack.c.b16 %v940, %v940
        %v957 = vpack.c.b16 %v941, %v941
        %v958 = vpack.c.b16 %v942, %v942
        %v959 = vpack.c.b16 %v943, %v943
        %v960 = vpack.c.b16 %v944, %v944
        %v961 = vpack.c.b16 %v945, %v945
        %v962 = vpack.c.b16 %v946, %v946
        %v963 = vpack.c.b16 %v947, %v947
        %v964 = vpack.c.b16 %v948, %v948
        %v965 = vpack.c.b16 %v949, %v949
        %v966 = vpack.c.b16 %v950, %v950
        %983 = vst [vmem:[%s368] sm:$0xf] %v951
        %984 = vst [vmem:[%s368 + $0x4] sm:$0xf] %v952
        %985 = vst [vmem:[%s368 + $0x8] sm:$0xf] %v953
        %986 = vst [vmem:[%s368 + $0xc] sm:$0xf] %v954
        %987 = vst [vmem:[%s368 + $0x10] sm:$0xf] %v955
        %988 = vst [vmem:[%s368 + $0x14] sm:$0xf] %v956
        %989 = vst [vmem:[%s368 + $0x18] sm:$0xf] %v957
        %990 = vst [vmem:[%s368 + $0x1c] sm:$0xf] %v958
        %991 = vst [vmem:[%s368 + $0x20] sm:$0xf] %v959
        %992 = vst [vmem:[%s368 + $0x24] sm:$0xf] %v960
        %993 = vst [vmem:[%s368 + $0x28] sm:$0xf] %v961
        %994 = vst [vmem:[%s368 + $0x2c] sm:$0xf] %v962
        %995 = vst [vmem:[%s368 + $0x30] sm:$0xf] %v963
        %996 = vst [vmem:[%s368 + $0x34] sm:$0xf] %v964
        %997 = vst [vmem:[%s368 + $0x38] sm:$0xf] %v965
        %998 = vst [vmem:[%s368 + $0x3c] sm:$0xf] %v966
        %v999 = vmul.f32 %v699, %v791
        %v1000 = vmul.f32 %v703, %v792
        %v1001 = vmul.f32 %v709, %v793
        %v1002 = vmul.f32 %v713, %v794
        %v1003 = vmul.f32 %v719, %v795
        %v1004 = vmul.f32 %v723, %v796
        %v1005 = vmul.f32 %v729, %v797
        %v1006 = vmul.f32 %v733, %v798
        %v1007 = vmul.f32 %v739, %v799
        %v1008 = vmul.f32 %v743, %v800
        %v1009 = vmul.f32 %v749, %v801
        %v1010 = vmul.f32 %v753, %v802
        %v1011 = vmul.f32 %v759, %v803
        %v1012 = vmul.f32 %v763, %v804
        %v1013 = vmul.f32 %v769, %v805
        %v1014 = vmul.f32 %v773, %v806
        %1015 = vrot.lane.b32.xlu0 %v699, 64
        %v1016 = vpop.permute.xlu0 %1015
        %1017 = vrot.lane.b32.xlu0 %v703, 64
        %v1018 = vpop.permute.xlu0 %1017
        %1019 = vrot.lane.b32.xlu0 %v709, 64
        %v1020 = vpop.permute.xlu0 %1019
        %1021 = vrot.lane.b32.xlu0 %v713, 64
        %v1022 = vpop.permute.xlu0 %1021
        %1023 = vrot.lane.b32.xlu0 %v719, 64
        %v1024 = vpop.permute.xlu0 %1023
        %1025 = vrot.lane.b32.xlu0 %v723, 64
        %v1026 = vpop.permute.xlu0 %1025
        %1027 = vrot.lane.b32.xlu0 %v729, 64
        %v1028 = vpop.permute.xlu0 %1027
        %1029 = vrot.lane.b32.xlu0 %v733, 64
        %v1030 = vpop.permute.xlu0 %1029
        %1031 = vrot.lane.b32.xlu0 %v739, 64
        %v1032 = vpop.permute.xlu0 %1031
        %1033 = vrot.lane.b32.xlu0 %v743, 64
        %v1034 = vpop.permute.xlu0 %1033
        %1035 = vrot.lane.b32.xlu0 %v749, 64
        %v1036 = vpop.permute.xlu0 %1035
        %1037 = vrot.lane.b32.xlu0 %v753, 64
        %v1038 = vpop.permute.xlu0 %1037
        %1039 = vrot.lane.b32.xlu0 %v759, 64
        %v1040 = vpop.permute.xlu0 %1039
        %1041 = vrot.lane.b32.xlu0 %v763, 64
        %v1042 = vpop.permute.xlu0 %1041
        %1043 = vrot.lane.b32.xlu0 %v769, 64
        %v1044 = vpop.permute.xlu0 %1043
        %1045 = vrot.lane.b32.xlu0 %v773, 64
        %v1046 = vpop.permute.xlu0 %1045
        %v1047 = vmul.f32 %v1016, %v823
        %v1048 = vmul.f32 %v1018, %v824
        %v1049 = vmul.f32 %v1020, %v825
        %v1050 = vmul.f32 %v1022, %v826
        %v1051 = vmul.f32 %v1024, %v827
        %v1052 = vmul.f32 %v1026, %v828
        %v1053 = vmul.f32 %v1028, %v829
        %v1054 = vmul.f32 %v1030, %v830
        %v1055 = vmul.f32 %v1032, %v831
        %v1056 = vmul.f32 %v1034, %v832
        %v1057 = vmul.f32 %v1036, %v833
        %v1058 = vmul.f32 %v1038, %v834
        %v1059 = vmul.f32 %v1040, %v835
        %v1060 = vmul.f32 %v1042, %v836
        %v1061 = vmul.f32 %v1044, %v837
        %v1062 = vmul.f32 %v1046, %v838
        %v1063 = vadd.f32 %v999, %v1047
        %v1064 = vadd.f32 %v1000, %v1048
        %v1065 = vadd.f32 %v1001, %v1049
        %v1066 = vadd.f32 %v1002, %v1050
        %v1067 = vadd.f32 %v1003, %v1051
        %v1068 = vadd.f32 %v1004, %v1052
        %v1069 = vadd.f32 %v1005, %v1053
        %v1070 = vadd.f32 %v1006, %v1054
        %v1071 = vadd.f32 %v1007, %v1055
        %v1072 = vadd.f32 %v1008, %v1056
        %v1073 = vadd.f32 %v1009, %v1057
        %v1074 = vadd.f32 %v1010, %v1058
        %v1075 = vadd.f32 %v1011, %v1059
        %v1076 = vadd.f32 %v1012, %v1060
        %v1077 = vadd.f32 %v1013, %v1061
        %v1078 = vadd.f32 %v1014, %v1062
        %v1079 = vpack.c.bf16 %v1064, %v1063
        %v1080 = vpack.c.bf16 %v1066, %v1065
        %v1081 = vpack.c.bf16 %v1068, %v1067
        %v1082 = vpack.c.bf16 %v1070, %v1069
        %v1083 = vpack.c.bf16 %v1072, %v1071
        %v1084 = vpack.c.bf16 %v1074, %v1073
        %v1085 = vpack.c.bf16 %v1076, %v1075
        %v1086 = vpack.c.bf16 %v1078, %v1077
        %v1095 = vunpack.c.l.b16 %v1079
        %v1096 = vunpack.c.h.b16 %v1079
        %v1097 = vunpack.c.l.b16 %v1080
        %v1098 = vunpack.c.h.b16 %v1080
        %v1099 = vunpack.c.l.b16 %v1081
        %v1100 = vunpack.c.h.b16 %v1081
        %v1101 = vunpack.c.l.b16 %v1082
        %v1102 = vunpack.c.h.b16 %v1082
        %v1103 = vunpack.c.l.b16 %v1083
        %v1104 = vunpack.c.h.b16 %v1083
        %v1105 = vunpack.c.l.b16 %v1084
        %v1106 = vunpack.c.h.b16 %v1084
        %v1107 = vunpack.c.l.b16 %v1085
        %v1108 = vunpack.c.h.b16 %v1085
        %v1109 = vunpack.c.l.b16 %v1086
        %v1110 = vunpack.c.h.b16 %v1086
        %v1111 = vpack.c.b16 %v1095, %v1095
        %v1112 = vpack.c.b16 %v1096, %v1096
        %v1113 = vpack.c.b16 %v1097, %v1097
        %v1114 = vpack.c.b16 %v1098, %v1098
        %v1115 = vpack.c.b16 %v1099, %v1099
        %v1116 = vpack.c.b16 %v1100, %v1100
        %v1117 = vpack.c.b16 %v1101, %v1101
        %v1118 = vpack.c.b16 %v1102, %v1102
        %v1119 = vpack.c.b16 %v1103, %v1103
        %v1120 = vpack.c.b16 %v1104, %v1104
        %v1121 = vpack.c.b16 %v1105, %v1105
        %v1122 = vpack.c.b16 %v1106, %v1106
        %v1123 = vpack.c.b16 %v1107, %v1107
        %v1124 = vpack.c.b16 %v1108, %v1108
        %v1125 = vpack.c.b16 %v1109, %v1109
        %v1126 = vpack.c.b16 %v1110, %v1110
        %s1143 = scalar_lea.vmem %s368, 64 [#allocation10]
        %1144 = vst [vmem:[%s1143] sm:$0xf] %v1111
        %1145 = vst [vmem:[%s1143 + $0x4] sm:$0xf] %v1112
        %1146 = vst [vmem:[%s1143 + $0x8] sm:$0xf] %v1113
        %1147 = vst [vmem:[%s1143 + $0xc] sm:$0xf] %v1114
        %1148 = vst [vmem:[%s1143 + $0x10] sm:$0xf] %v1115
        %1149 = vst [vmem:[%s1143 + $0x14] sm:$0xf] %v1116
        %1150 = vst [vmem:[%s1143 + $0x18] sm:$0xf] %v1117
        %1151 = vst [vmem:[%s1143 + $0x1c] sm:$0xf] %v1118
        %1152 = vst [vmem:[%s1143 + $0x20] sm:$0xf] %v1119
        %1153 = vst [vmem:[%s1143 + $0x24] sm:$0xf] %v1120
        %1154 = vst [vmem:[%s1143 + $0x28] sm:$0xf] %v1121
        %1155 = vst [vmem:[%s1143 + $0x2c] sm:$0xf] %v1122
        %1156 = vst [vmem:[%s1143 + $0x30] sm:$0xf] %v1123
        %1157 = vst [vmem:[%s1143 + $0x34] sm:$0xf] %v1124
        %1158 = vst [vmem:[%s1143 + $0x38] sm:$0xf] %v1125
        %1159 = vst [vmem:[%s1143 + $0x3c] sm:$0xf] %v1126
        %s1160 = sand.u32 %s168, 1
        %s1161 = scalar_lea.sflag [#allocation4], %s1160
        %s1162 = sand.u32 %s168, 1
        %s1163 = smul.addr %s1162, 128
        %s1164 = scalar_lea.vmem [#allocation10], %s1163
        // Predicated region
        $region53: #{tpu_custom_call.1} parent=35 // pred_check
          %p1165 = pneg %p178
        $region54: #{tpu_custom_call.1} parent=35 // pred_check_branch
          %1167 = sbr.rel (%p1165) target = $region56
        $region55: #{tpu_custom_call.1} parent=35 // pred_region
          #allocation12 [shape = 'u32[6]{0}', space=smem, size = 0x18, scoped, tag = 'DMA stride descriptor']
          %s1168 = smul.u32 2, %s34
          %s1169 = smul.u32 16, %s33
          %s1171 = ssub.s32 2048, 2048
          %1172 = vsyncadd %s1161, %s1171
          %s1173 = smul.addr %s1168, 32
          %s1174 = sadd.s32 %s1169, %s1173
          %s1175 = smul.addr %s32, 192
          %s1176 = sadd.s32 %s1174, %s1175
          %s1177 = smul.addr %s1176, 64
          %s1178 = scalar_lea.hbm %s4, %s1177
          %s1180 = sshll.u32 1, 14
          %s1181 = sxor.u32 4294967295, %s1180
          %s1184 = sshll.u32 7, 18
          %s1185 = sxor.u32 4294967295, %s1184
          %s1186 = sand.u32 0, %s1185
          %s1188 = sor.u32 %s1186, 0
          %s1190 = sshll.u32 3, 24
          %s1191 = sxor.u32 4294967295, %s1190
          %s1192 = sand.u32 %s1188, %s1191
          %s1194 = sor.u32 %s1192, 0
          %s1195 = sshll.u32 %s1164, 4
          %s1196 = int_to_ptr.vmem [resolvable:$true] %s1195
          %1202 = sst [smem:[#allocation12]] 1024
          %s1203 = scalar_lea.smem [#allocation12], 1
          %1204 = sst [smem:[%s1203]] 2048
          %s1205 = scalar_lea.smem [#allocation12], 2
          %1206 = sst [smem:[%s1205]] 16
          %s1207 = scalar_lea.smem [#allocation12], 3
          %1208 = sst [smem:[%s1207]] 64
          %s1209 = scalar_lea.smem [#allocation12], 4
          %1210 = sst [smem:[%s1209]] 64
          %s1211 = scalar_lea.smem [#allocation12], 5
          %1212 = sst [smem:[%s1211]] 4
          %1214 = dma.general %s1196, 2048, %s1178, %s1161, [#allocation11], [#allocation12], %s1194, 0
        $region56: #{tpu_custom_call.1} parent=35 // pred_fallthru
          _
      $region36: #{tpu_custom_call.1} parent=5 // pred_fallthru
        _
      %p1215 = scmp.le.s32.totalorder 2, %s22
      // Predicated region
      $region57: #{tpu_custom_call.1} parent=5 // pred_check
        %p1216 = pneg %p1215
      $region58: #{tpu_custom_call.1} parent=5 // pred_check_branch
        %1218 = sbr.rel (%p1216) target = $region60
      $region59: #{tpu_custom_call.1} parent=5 // pred_region
        %s1219 = ssub.s32 %s22, 2
        // Predicated region
        $region61: #{tpu_custom_call.1} parent=59 // pred_check
          %p1220 = pneg %p184
        $region62: #{tpu_custom_call.1} parent=59 // pred_check_branch
          %1222 = sbr.rel (%p1220) target = $region64
        $region63: #{tpu_custom_call.1} parent=59 // pred_region
          %s1223 = sand.u32 %s169, 1
          %s1224 = scalar_lea.sflag [#allocation4], %s1223
          %s1225 = sand.u32 %s169, 1
          %s1226 = smul.addr %s1225, 128
          %s1227 = scalar_lea.vmem [#allocation10], %s1226
          %1228 = dma.done %s1224, 2048
        $region64: #{tpu_custom_call.1} parent=59 // pred_fallthru
          _
      $region60: #{tpu_custom_call.1} parent=5 // pred_fallthru
        _
    $region6: #{tpu_custom_call.1} parent=1 // loop_footer
      %s26 = sadd.s32 1, %s22
    $region7: #{tpu_custom_call.1} parent=1 // loop_footer_branch
      %21 = sbr.rel target = $region3
    $region8: #{tpu_custom_call.1} parent=1 // loop_exit
      _
    %1229 = vsyncpa [#allocation3], 1
    %s1230 = scalar_lea.sflag [#allocation3], 1
    %1231 = vsyncpa %s1230, 1
    %1232 = vsyncpa [#allocation6], 1
    %s1233 = scalar_lea.sflag [#allocation6], 1
    %1234 = vsyncpa %s1233, 1
    %1235 = vsyncpa [#allocation9], 1
    %s1236 = scalar_lea.sflag [#allocation9], 1
    %1237 = vsyncpa %s1236, 1
    %1238 = vsyncpa [#allocation4], 1
    %s1239 = scalar_lea.sflag [#allocation4], 1
    %1240 = vsyncpa %s1239, 1

</llo_original>
